<compile_context>
chip_gen: v7x
topology: tpu7x:2x2x1
jax: 0.10.0
libtpu: 0.0.40
codegen_flags: <defaults>
</compile_context>

<pallas_src>
import functools

import jax
import jax.numpy as jnp
from jax import lax
from jax.experimental import pallas as pl
from jax.experimental.pallas import tpu as pltpu

_TARGET_TILE_BYTES = 4 * 1024 * 1024      # ~4 MiB per tile
_VMEM_LIMIT_BYTES = 48 * 1024 * 1024      # explicit scoped-VMEM limit (fits all gens)


def _cdiv(a: int, b: int) -> int:
    return (a + b - 1) // b


def _round_up(a: int, b: int) -> int:
    return _cdiv(a, b) * b


def _dropout_kernel(seed_ref, x_ref, o_ref, *, threshold24: int, scale: float,
                    tile_rows: int, lane: int, shift: int):
    """One (tile_rows, lane) block: keep-mask from a counter hash, scale, store."""
    # Unique per-element code: (global_row << shift) | col, shift = ceil(log2(lane)).
    # The global row base is a scalar-unit multiply; no per-element index multiplies.
    base_rows = pl.program_id(0) * tile_rows                        # scalar int32
    row = lax.broadcasted_iota(jnp.int32, (tile_rows, lane), 0)
    col = lax.broadcasted_iota(jnp.int32, (tile_rows, lane), 1)
    grow = (row + base_rows).astype(jnp.uint32)
    code = (grow << shift) | col.astype(jnp.uint32)

    # splitmix-style counter hash, trimmed to 2 vector multiplies per element.
    seed_u = seed_ref[0].astype(jnp.uint32)
    z = (code + jnp.uint32(1)) * jnp.uint32(0x9E3779B9) + seed_u
    z = z ^ (z >> 16)
    z = z * jnp.uint32(0x85EBCA6B)
    z = z ^ (z >> 15)

    # Top 24 bits -> uniform draw in [0, 2^24); static threshold < 2^24 so the
    # comparison is a plain int32 compare.
    r24 = (z >> 8).astype(jnp.int32)
    keep = r24 >= jnp.int32(threshold24)

    x = x_ref[...]
    scaled = x * jnp.asarray(scale, dtype=x.dtype)                  # math in input dtype
    o_ref[...] = jnp.where(keep, scaled, jnp.zeros_like(x)).astype(o_ref.dtype)
    # TODO(synk): bf16 could draw one 32-bit word per element pair (16-bit
    # threshold compare in the [16,128] packing) to halve mask work; skipped for
    # lowering robustness.


def _as_2d_lane_dense(x):
    """Present x as a lane-dense 2-D slab (rows, lane) with lane % 128 == 0.

    Returns (x2, lane, rows, padded_total).  Avoids any host-side copy whenever
    possible: collapsing leading dims or splitting a 128-multiple flat size are
    free reshapes; only total % 128 != 0 takes the pad fallback.
    """
    total = int(x.size)
    if x.ndim >= 2 and x.shape[-1] % 128 == 0:
        lane = int(x.shape[-1])
        rows = total // lane
        return x.reshape(rows, lane), lane, rows, total
    for lane in (1024, 512, 256, 128):
        if total % lane == 0:
            rows = total // lane
            return x.reshape(rows, lane), lane, rows, total
    # Fallback: pad the tail to a lane multiple (one extra HBM copy each way).
    lane = 1024 if total >= 1024 else 128
    padded = _round_up(total, lane)
    flat = jnp.pad(x.reshape(-1), (0, padded - total))
    rows = padded // lane
    return flat.reshape(rows, lane), lane, rows, padded


def dropout(x, p: float, seed: int, training: bool = True,
            apply_during_inference: bool = False):
    """Pallas implementation of Dropout.forward (functional, out-of-place)."""
    if not (training or apply_during_inference) or p == 0.0:
        return x                       # identity path, same as the PyTorch eval branch
    if p >= 1.0:
        return jnp.zeros_like(x)       # drop everything; avoid 1/(1-p) overflow
    if x.size == 0:
        return x

    orig_shape = x.shape
    total = int(x.size)
    x2, lane, rows, padded = _as_2d_lane_dense(x)

    itemsize = jnp.dtype(x.dtype).itemsize
    sub = 8 * max(1, 4 // itemsize)               # sublane multiple: 8 f32, 16 bf16
    max_rows = max(sub, (_TARGET_TILE_BYTES // (lane * itemsize)) // sub * sub)
    if rows <= sub:
        tile_rows = rows                          # full dim: exempt from the 8-row rule
    else:
        # Cap so the grid has >=2 steps (megacore split on v7x) and <=~4 MiB tiles.
        tile_rows = min(max_rows, _round_up(_cdiv(rows, 2), sub))
    grid = _cdiv(rows, tile_rows)                 # partial tail block handled by Pallas

    threshold24 = max(0, min(int(round(p * float(1 << 24))), (1 << 24) - 1))
    scale = 1.0 / (1.0 - p)
    shift = max(1, (lane - 1).bit_length())       # ceil(log2(lane))

    kernel = functools.partial(_dropout_kernel, threshold24=threshold24,
                               scale=scale, tile_rows=tile_rows, lane=lane,
                               shift=shift)

    out = pl.pallas_call(
        kernel,
        out_shape=jax.ShapeDtypeStruct((rows, lane), x.dtype),
        grid_spec=pltpu.PrefetchScalarGridSpec(
            num_scalar_prefetch=1,                # seed lands in SMEM
            grid=(grid,),
            in_specs=[pl.BlockSpec((tile_rows, lane),
                                   lambda i, seed_ref: (i, 0))],
            out_specs=pl.BlockSpec((tile_rows, lane),
                                   lambda i, seed_ref: (i, 0)),
        ),
        compiler_params=pltpu.CompilerParams(
            dimension_semantics=("parallel",),
            vmem_limit_bytes=_VMEM_LIMIT_BYTES),
    )(jnp.array([seed], dtype=jnp.int32), x2)

    if padded != total:
        return out.reshape(-1)[:total].reshape(orig_shape)
    return out.reshape(orig_shape)


# TODO(synk): `inplace=True` and make_generation_fast_ are host-side module
# config (no tensor math); only the functional out-of-place forward is here.


if __name__ == "__main__":
    key = jax.random.PRNGKey(0)

    # Transformer-activation-like shape (batch, seq, hidden).
    batch, seq, hidden = 2, 8, 32
    p = 0.25
    x = jax.random.normal(key, (batch, seq, hidden), dtype=jnp.float32)

    # Training-mode dropout (the hot path, runs in the Pallas kernel).
    y = jax.block_until_ready(dropout(x, p=p, seed=1234, training=True))
    # Eval mode: identity, matches the PyTorch branch.
    y_eval = jax.block_until_ready(dropout(x, p=p, seed=1234, training=False))

    # Survivors must equal x / (1 - p); dropped fraction should be roughly p.
    mask = (y != 0.0)
    assert jnp.allclose(jnp.where(mask, y, 0.0),
                        jnp.where(mask, x / (1.0 - p), 0.0),
                        rtol=1e-5, atol=1e-5)
    drop_frac = 1.0 - float(jnp.mean(mask.astype(jnp.float32)))
    assert 0.05 < drop_frac < 0.55, f"unexpected drop fraction {drop_frac}"
    assert jnp.array_equal(y_eval, x)
    assert jnp.array_equal(dropout(x, p=0.0, seed=1, training=True), x)
    assert jnp.all(dropout(x, p=1.0, seed=1, training=True) == 0.0)

    # Native lane path (last dim multiple of 128): no pad, no slice, grid of 2.
    x128 = jax.random.normal(jax.random.PRNGKey(1), (2, 8, 128), dtype=jnp.float32)
    y128 = jax.block_until_ready(dropout(x128, p=0.1, seed=7, training=True))
    m128 = (y128 != 0.0)
    assert jnp.allclose(jnp.where(m128, y128, 0.0),
                        jnp.where(m128, x128 / 0.9, 0.0),
                        rtol=1e-5, atol=1e-5)

    # Awkward size (total % 128 != 0): exercises the pad fallback path.
    xodd = jax.random.normal(jax.random.PRNGKey(2), (5, 33), dtype=jnp.float32)
    yodd = jax.block_until_ready(dropout(xodd, p=0.5, seed=3, training=True))
    assert yodd.shape == xodd.shape
    modd = (yodd != 0.0)
    assert jnp.allclose(jnp.where(modd, yodd, 0.0),
                        jnp.where(modd, xodd * 2.0, 0.0),
                        rtol=1e-5, atol=1e-5)

    print("KERNEL_OK")
</pallas_src>

<mosaic_0001>
module attributes {stable_mosaic.version = 11 : i64} {
  func.func @_dropout_kernel(%arg0: i32, %arg1: memref<1xi32, #tpu.memory_space<smem>>, %arg2: memref<1x512xf32, #tpu.memory_space<vmem>>, %arg3: memref<1x512xf32, #tpu.memory_space<vmem>>) attributes {dimension_semantics = [#tpu.dimension_semantics<parallel>], iteration_bounds = array<i64: 1>, scalar_prefetch = 1 : i64, scratch_operands = 0 : i64, tpu.core_type = #tpu.core_type<tc>, window_params = [{transform_indices = @transform_0, window_bounds = array<i64: 1, 512>}, {transform_indices = @transform_1, window_bounds = array<i64: 1, 512>}]} {
    %c1_i32 = arith.constant 1 : i32
    %0 = arith.muli %arg0, %c1_i32 : i32
    %1 = tpu.iota {dimensions = array<i32: 0>} : vector<1x512xi32>
    %2 = tpu.iota {dimensions = array<i32: 1>} : vector<1x512xi32>
    %3 = vector.broadcast %0 : i32 to vector<1x512xi32>
    %4 = arith.addi %1, %3 : vector<1x512xi32>
    %c9_i32 = arith.constant 9 : i32
    %5 = vector.broadcast %c9_i32 : i32 to vector<1x512xi32>
    %6 = arith.shli %4, %5 : vector<1x512xi32>
    %7 = arith.ori %6, %2 : vector<1x512xi32>
    %c0 = arith.constant 0 : index
    %8 = memref.load %arg1[%c0] : memref<1xi32, #tpu.memory_space<smem>>
    %c1_i32_0 = arith.constant 1 : i32
    %9 = vector.broadcast %c1_i32_0 : i32 to vector<1x512xi32>
    %10 = arith.addi %7, %9 : vector<1x512xi32>
    %c-1640531527_i32 = arith.constant -1640531527 : i32
    %11 = vector.broadcast %c-1640531527_i32 : i32 to vector<1x512xi32>
    %12 = arith.muli %10, %11 : vector<1x512xi32>
    %13 = vector.broadcast %8 : i32 to vector<1x512xi32>
    %14 = arith.addi %12, %13 : vector<1x512xi32>
    %c16_i32 = arith.constant 16 : i32
    %15 = vector.broadcast %c16_i32 : i32 to vector<1x512xi32>
    %16 = arith.shrui %14, %15 : vector<1x512xi32>
    %17 = arith.xori %14, %16 : vector<1x512xi32>
    %c-2048144789_i32 = arith.constant -2048144789 : i32
    %18 = vector.broadcast %c-2048144789_i32 : i32 to vector<1x512xi32>
    %19 = arith.muli %17, %18 : vector<1x512xi32>
    %c15_i32 = arith.constant 15 : i32
    %20 = vector.broadcast %c15_i32 : i32 to vector<1x512xi32>
    %21 = arith.shrui %19, %20 : vector<1x512xi32>
    %22 = arith.xori %19, %21 : vector<1x512xi32>
    %c8_i32 = arith.constant 8 : i32
    %23 = vector.broadcast %c8_i32 : i32 to vector<1x512xi32>
    %24 = arith.shrui %22, %23 : vector<1x512xi32>
    %c4194304_i32 = arith.constant 4194304 : i32
    %25 = vector.broadcast %c4194304_i32 : i32 to vector<1x512xi32>
    %26 = arith.cmpi sge, %24, %25 : vector<1x512xi32>
    %c0_1 = arith.constant 0 : index
    %c0_2 = arith.constant 0 : index
    %27 = vector.load %arg2[%c0_1, %c0_2] : memref<1x512xf32, #tpu.memory_space<vmem>>, vector<1x512xf32>
    %cst = arith.constant 1.33333337 : f32
    %28 = vector.broadcast %cst : f32 to vector<1x512xf32>
    %29 = arith.mulf %27, %28 : vector<1x512xf32>
    %cst_3 = arith.constant 0.000000e+00 : f32
    %30 = vector.broadcast %cst_3 : f32 to vector<1x512xf32>
    %31 = arith.select %26, %29, %30 : vector<1x512xi1>, vector<1x512xf32>
    %c0_4 = arith.constant 0 : index
    %c0_5 = arith.constant 0 : index
    %32 = vector.load %arg3[%c0_4, %c0_5] : memref<1x512xf32, #tpu.memory_space<vmem>>, vector<1x512xf32>
    tpu.vector_store %arg3[%c0_4, %c0_5], %31 {strides = array<i32>} : memref<1x512xf32, #tpu.memory_space<vmem>>, vector<1x512xf32>,
    return
  }
  func.func @transform_0(%arg0: i32, %arg1: memref<1xi32, #tpu.memory_space<smem>>) -> (i32, i32) {
    %c0_i32 = arith.constant 0 : i32
    %c0_i32_0 = arith.constant 0 : i32
    return %arg0, %c0_i32 : i32, i32
  }
  func.func @transform_1(%arg0: i32, %arg1: memref<1xi32, #tpu.memory_space<smem>>) -> (i32, i32) {
    %c0_i32 = arith.constant 0 : i32
    %c0_i32_0 = arith.constant 0 : i32
    return %arg0, %c0_i32 : i32, i32
  }
}

</mosaic_0001>

<llo_original>
// kernel: tpu_custom_call.1
$region0: #{tpu_custom_call.1}
  #allocation0 [shape = 'u32[]', space=smem, size = 0x4, offset = 0x4, fixed_abs, tag = 'smem constant byte address 0x4 - core index']
  #allocation1 [shape = 'u32[144,128]{1,0:T(1,128)}', space=vmem, size = 0x12000, scoped, tag = 'internal scratch']
  #allocation2 [shape = 's32[1]{0}', space=sflag, size = 0x4, scoped, tag = 'scoped memory for tpu_custom_call.1']
  #allocation3 [shape = 's32[1]{0:T(128)S(6)}', space=smem, size = 0x200, scoped, tag = 'prefetched SMEM operand 0']
  %s0 = inlined_call_operand.<no memory space> [shape: s32[1], index: 0, kind: input, shape index: {}]
  %s1 = inlined_call_operand.hbm [shape: f32[1,512], index: 1, kind: input, shape index: {}]
  %s2 = inlined_call_operand.hbm [shape: f32[1,512], index: 2, kind: output, shape index: {}]
  %s3 = sld [smem:[#allocation0]]
  $region18: #{tpu_custom_call.1} parent=0
    _
  %s5 = ssub.s32 1, %s3
  %s6 = scalar_select 0, %s5, %s3
  %7 = sst [smem:[#allocation3]] %s0
  $region1: #{tpu_custom_call.1} parent=0
    #allocation4 [shape = 'u8[2048]{0}', space=vmem, size = 0x800, scoped, tag = 'input window, operand 1, single buffered']
    #allocation5 [shape = 's32[1]{0}', space=sflag, size = 0x4, scoped, tag = 'scoped memory for tpu_custom_call.1']
    #allocation6 [shape = 's32[1]{0}', space=sflag, size = 0x4, scoped, tag = 'scoped memory for tpu_custom_call.1']
    #allocation7 [shape = 'u8[2048]{0}', space=vmem, size = 0x800, scoped, tag = 'output window, operand 0, single buffered']
    %8 = vsyncpa [#allocation5], 0
    %9 = vsyncpa [#allocation6], 0
    // Predicated region
    $region2: #{tpu_custom_call.1} parent=1 // pred_check
      _
    $region3: #{tpu_custom_call.1} parent=1 // pred_check_branch
      %11 = sbr.rel (0) target = $region5
    $region4: #{tpu_custom_call.1} parent=1 // pred_region
      %s13 = ssub.s32 64, 64
      %14 = vsyncadd [#allocation5], %s13
      %s16 = sshll.u32 [#allocation4], 4
      %s17 = int_to_ptr.vmem [resolvable:$true] %s16
      %19 = dma.hbm_to_vmem [thread:$0]  %s1, 64, %s17, [#allocation5]
    $region5: #{tpu_custom_call.1} parent=1 // pred_fallthru
      _
    // Predicated region
    $region6: #{tpu_custom_call.1} parent=1 // pred_check
      _
    $region7: #{tpu_custom_call.1} parent=1 // pred_check_branch
      %21 = sbr.rel (0) target = $region9
    $region8: #{tpu_custom_call.1} parent=1 // pred_region
      %22 = dma.done [#allocation5], 64
    $region9: #{tpu_custom_call.1} parent=1 // pred_fallthru
      _
    %v23 = vlaneseq
    %v24 = vshrl.u32 %v23, 7
    %v25 = vlaneseq
    %v26 = vand.u32 %v25, 127
    %v27 = vadd.s32 %v26, 128
    %v28 = vadd.s32 %v26, 256
    %v29 = vadd.s32 %v26, 384
    %v30 = vstv 0
    %v31 = vadd.s32 %v24, %v30
    %v32 = vshll.u32 %v31, 9
    %v33 = vor.u32 %v32, %v26
    %v34 = vor.u32 %v32, %v27
    %v35 = vor.u32 %v32, %v28
    %v36 = vor.u32 %v32, %v29
    %s37 = sld [smem:[#allocation3]]
    %v38 = vadd.s32 %v33, 1
    %v39 = vadd.s32 %v34, 1
    %v40 = vadd.s32 %v35, 1
    %v41 = vadd.s32 %v36, 1
    %v42 = vmul.u32 %v38, 2654435769
    %v43 = vmul.u32 %v39, 2654435769
    %v44 = vmul.u32 %v40, 2654435769
    %v45 = vmul.u32 %v41, 2654435769
    %v46 = vstv %s37
    %v47 = vadd.s32 %v42, %v46
    %v48 = vadd.s32 %v43, %v46
    %v49 = vadd.s32 %v44, %v46
    %v50 = vadd.s32 %v45, %v46
    %v51 = vshrl.u32 %v47, 16
    %v52 = vshrl.u32 %v48, 16
    %v53 = vshrl.u32 %v49, 16
    %v54 = vshrl.u32 %v50, 16
    %v55 = vxor.u32 %v47, %v51
    %v56 = vxor.u32 %v48, %v52
    %v57 = vxor.u32 %v49, %v53
    %v58 = vxor.u32 %v50, %v54
    %v59 = vmul.u32 %v55, 2246822507
    %v60 = vmul.u32 %v56, 2246822507
    %v61 = vmul.u32 %v57, 2246822507
    %v62 = vmul.u32 %v58, 2246822507
    %v63 = vshrl.u32 %v59, 15
    %v64 = vshrl.u32 %v60, 15
    %v65 = vshrl.u32 %v61, 15
    %v66 = vshrl.u32 %v62, 15
    %v67 = vxor.u32 %v59, %v63
    %v68 = vxor.u32 %v60, %v64
    %v69 = vxor.u32 %v61, %v65
    %v70 = vxor.u32 %v62, %v66
    %v71 = vshrl.u32 %v67, 8
    %v72 = vshrl.u32 %v68, 8
    %v73 = vshrl.u32 %v69, 8
    %v74 = vshrl.u32 %v70, 8
    %vm75 = vcmp.ge.s32.totalorder %v71, 4194304
    %vm76 = vcmp.ge.s32.totalorder %v72, 4194304
    %vm77 = vcmp.ge.s32.totalorder %v73, 4194304
    %vm78 = vcmp.ge.s32.totalorder %v74, 4194304
    %v79 = vld [vmem:[#allocation4] sm:$0xf]
    %v80 = vmul.f32 %v79, 1.3333334
    %v82 = vlaneseq
    %v83 = vshrl.u32 %v82, 7
    %v84 = vsub.s32 0, %v83
    %v85 = vrot.slane %v80, %v84
    %v86 = vlaneseq
    %v87 = vshrl.u32 %v86, 7
    %v88 = vsub.s32 1, %v87
    %v89 = vrot.slane %v80, %v88
    %v90 = vlaneseq
    %v91 = vshrl.u32 %v90, 7
    %v92 = vsub.s32 2, %v91
    %v93 = vrot.slane %v80, %v92
    %v94 = vlaneseq
    %v95 = vshrl.u32 %v94, 7
    %v96 = vsub.s32 3, %v95
    %v97 = vrot.slane %v80, %v96
    %v102 = vsel %vm75, %v85, 0.0
    %v103 = vsel %vm76, %v89, 0.0
    %v104 = vsel %vm77, %v93, 0.0
    %v105 = vsel %vm78, %v97, 0.0
    %v110 = vcombine.low %v102, %v103
    %v111 = vcombine.low %v104, %v105
    %v113 = vunpack.c.l.s4 1966171168
    %v114 = vunpack.c.0.s8 %v113
    %v115 = vlaneseq
    %v116 = vshrl.u32 %v115, 7
    %v117 = vsub.s32 %v114, %v116
    %v118 = vrot.slane %v110, %v117
    %v120 = vunpack.c.l.s4 1966171168
    %v121 = vunpack.c.0.s8 %v120
    %v122 = vlaneseq
    %v123 = vshrl.u32 %v122, 7
    %v124 = vsub.s32 %v121, %v123
    %v125 = vrot.slane %v111, %v124
    %v126 = vcombine.low %v118, %v125
    %v128 = vunpack.c.l.s4 1966171168
    %v129 = vunpack.c.0.s8 %v128
    %v130 = vlaneseq
    %v131 = vshrl.u32 %v130, 7
    %v132 = vsub.s32 %v129, %v131
    %v133 = vrot.slane %v126, %v132
    %v135 = vlaneseq
    %vm136 = vcmp.ge.s32.totalorder %v135, 0
    %vm137 = vcmp.lt.s32.totalorder %v135, 512
    %vm138 = vmand %vm136, %vm137
    %139 = vst.msk [vmem:[#allocation7] sm:$0xf] %vm138, %v133
    // Predicated region
    $region10: #{tpu_custom_call.1} parent=1 // pred_check
      _
    $region11: #{tpu_custom_call.1} parent=1 // pred_check_branch
      %141 = sbr.rel (0) target = $region13
    $region12: #{tpu_custom_call.1} parent=1 // pred_region
      %s143 = ssub.s32 64, 64
      %144 = vsyncadd [#allocation6], %s143
      %s146 = sshll.u32 [#allocation7], 4
      %s147 = int_to_ptr.vmem [resolvable:$true] %s146
      %149 = dma.vmem_to_hbm [thread:$0]  %s147, 64, %s2, [#allocation6]
    $region13: #{tpu_custom_call.1} parent=1 // pred_fallthru
      _
    // Predicated region
    $region14: #{tpu_custom_call.1} parent=1 // pred_check
      _
    $region15: #{tpu_custom_call.1} parent=1 // pred_check_branch
      %151 = sbr.rel (0) target = $region17
    $region16: #{tpu_custom_call.1} parent=1 // pred_region
      %152 = dma.done [#allocation6], 64
    $region17: #{tpu_custom_call.1} parent=1 // pred_fallthru
      _
    %153 = vsyncpa [#allocation5], 1
    %154 = vsyncpa [#allocation6], 1

</llo_original>
